<compile_context>
chip_gen: v5e
topology: v5e:2x2
jax: 0.10.0
libtpu: 0.0.40
codegen_flags: <defaults>
</compile_context>

<pallas_src>
import functools

import jax
import jax.numpy as jnp
from jax.experimental import pallas as pl
from jax.experimental.pallas import tpu as pltpu


_LANE = 128
_SUBLANE = 8
_BLOCK_BUDGET_BYTES = 4 * 1024 * 1024   # per input block (x2 for double buffering)
_MIN_BLOCK_BYTES = 512 * 1024           # below this per-step pipeline overhead dominates


def _round_up(x, m):
    return ((x + m - 1) // m) * m


def _largest_aligned_divisor(n, limit):
    """Largest multiple of 8 that divides n and is <= limit (requires n % 8 == 0)."""
    d = (max(_SUBLANE, min(limit, n)) // _SUBLANE) * _SUBLANE
    while d > _SUBLANE:
        if n % d == 0:
            return d
        d -= _SUBLANE
    return _SUBLANE


def _choose_tiles(rows, cols, itemsize, budget):
    """Pick (row_tile, col_tile).

    Prefers a single full-width column block (no padding, lane-dense loads); falls
    back to streaming the spatial reduction over column blocks only when a single
    8-row x H*W block would exceed the per-block VMEM budget.
    """
    floor_bytes = min(_MIN_BLOCK_BYTES, budget)
    if _SUBLANE * cols * itemsize <= budget:
        # --- main path: one column block covering all of H*W ---
        col_tile = cols
        row_bytes = cols * itemsize
        budget_rows = max(_SUBLANE, (budget // row_bytes) // _SUBLANE * _SUBLANE)
        floor_rows = max(_SUBLANE, _round_up(max(1, floor_bytes // row_bytes), _SUBLANE))
        want_blocks_rows = _round_up(max(1, -(-rows // 8)), _SUBLANE)  # aim for >=8 row blocks
        target = min(budget_rows, max(floor_rows, want_blocks_rows), _round_up(rows, _SUBLANE))
        if rows % _SUBLANE == 0:
            row_tile = _largest_aligned_divisor(rows, target)  # exact divisor -> no row padding
        else:
            row_tile = max(_SUBLANE, target)                    # rare: rows padded up (small copy)
    else:
        # --- streaming path: giant spatial map, reduce over column blocks ---
        max_col = max(_LANE, (budget // (_SUBLANE * itemsize)) // _LANE * _LANE)
        nk = -(-cols // max_col)
        col_tile = _round_up(-(-cols // nk), _LANE)             # minimizes column padding
        row_bytes = col_tile * itemsize
        budget_rows = max(_SUBLANE, (budget // row_bytes) // _SUBLANE * _SUBLANE)
        row_tile = min(budget_rows, _round_up(rows, _SUBLANE))
    return row_tile, col_tile


def _gem_kernel(p_ref, x_ref, o_ref, acc_ref, *, eps, cols, col_tile, inv_cols):
    # p_ref:   (1,) learnable exponent p in SMEM
    # x_ref:   (row_tile, col_tile) tile in VMEM
    # o_ref:   (1, 1, row_tile) lane-dense output tile in VMEM
    # acc_ref: (row_tile, 1) f32 accumulator scratch (sum of x**p over H*W)
    k = pl.program_id(1)

    @pl.when(k == 0)
    def _():
        acc_ref[...] = jnp.zeros_like(acc_ref)

    p = p_ref[0]
    x = x_ref[...].astype(jnp.float32)
    x = jnp.maximum(x, eps)                       # clamp(min=eps) -> strictly positive
    xp = jnp.exp(p * jnp.log(x))                  # x ** p (VPU mul + 2 EUP ops)

    if cols % col_tile != 0:                      # static: only when columns were padded
        lane = jax.lax.broadcasted_iota(jnp.int32, xp.shape, 1)
        xp = jnp.where(k * col_tile + lane < cols, xp, 0.0)

    acc_ref[...] += jnp.sum(xp, axis=-1, keepdims=True)

    @pl.when(k == pl.num_programs(1) - 1)
    def _():
        inv_p = 1.0 / p                           # scalar; no per-element vector divide
        mean = acc_ref[...] * inv_cols            # avg_pool over true H*W
        out = jnp.exp(jnp.log(mean) * inv_p)      # mean ** (1/p)
        # (row_tile, 1) -> (1, 1, row_tile): present a lane-dense output row.
        o_ref[...] = out.reshape(1, 1, -1).astype(o_ref.dtype)


def gem_forward(x, p, eps=1e-6, *, block_budget_bytes=_BLOCK_BUDGET_BYTES):
    """GeM pooling. x: (B, C, H, W) float array, p: scalar exponent. Returns (B, C, 1, 1)."""
    B, C, H, W = x.shape
    rows, cols = B * C, H * W
    itemsize = jnp.dtype(x.dtype).itemsize
    x2d = x.reshape(rows, cols)                   # contiguous merge -> free, no copy

    row_tile, col_tile = _choose_tiles(rows, cols, itemsize, int(block_budget_bytes))
    rows_pad = _round_up(rows, row_tile)
    cols_pad = _round_up(cols, col_tile)
    if rows_pad != rows or cols_pad != cols:
        # Rare (only the streaming path or non-multiple-of-8 row counts). Pad value
        # 1.0 keeps log/exp finite; padded columns are masked in-kernel, padded rows
        # are sliced off below.
        x2d = jnp.pad(x2d, ((0, rows_pad - rows), (0, cols_pad - cols)),
                      constant_values=1.0)

    num_row_blocks = rows_pad // row_tile
    num_col_blocks = cols_pad // col_tile

    p_arr = jnp.asarray(p, dtype=jnp.float32).reshape(1)

    kernel = functools.partial(
        _gem_kernel,
        eps=float(eps),            # static python floats/ints -> no captured constants
        cols=int(cols),
        col_tile=int(col_tile),
        inv_cols=1.0 / float(cols),
    )

    out = pl.pallas_call(
        kernel,
        out_shape=jax.ShapeDtypeStruct((num_row_blocks, 1, row_tile), x.dtype),
        grid=(num_row_blocks, num_col_blocks),        # reduction axis last
        in_specs=[
            pl.BlockSpec(memory_space=pltpu.MemorySpace.SMEM),          # p scalar
            pl.BlockSpec((row_tile, col_tile), lambda i, k: (i, k)),    # x tile
        ],
        out_specs=pl.BlockSpec((1, 1, row_tile), lambda i, k: (i, 0, 0)),
        scratch_shapes=[pltpu.VMEM((row_tile, 1), jnp.float32)],
        compiler_params=pltpu.CompilerParams(
            dimension_semantics=("parallel", "arbitrary"),
            vmem_limit_bytes=32 * 1024 * 1024,       # >= 2x max block; safe on v5e/v6e/v7x
        ),
        cost_estimate=pl.CostEstimate(
            flops=3 * rows * cols,
            transcendentals=2 * rows * cols,
            bytes_accessed=rows * cols * itemsize + rows * itemsize,
        ),
    )(p_arr, x2d)

    return out.reshape(-1)[:rows].reshape(B, C, 1, 1)


def gem_reference(x, p, eps=1e-6):
    xc = jnp.maximum(x, eps) ** p
    m = jnp.mean(xc, axis=(-2, -1), keepdims=True)
    return m ** (1.0 / p)


if __name__ == "__main__":
    key = jax.random.PRNGKey(0)
    eps = 1e-6
    p_param = jnp.float32(3.0)   # matches nn.Parameter(torch.ones(1) * 3)

    # Small shape: single block, single column block (no padding anywhere).
    x1 = jax.random.uniform(jax.random.fold_in(key, 0), (2, 4, 16, 16),
                            dtype=jnp.float32, minval=-0.5, maxval=2.0)
    o1 = jax.block_until_ready(gem_forward(x1, p_param, eps=eps))
    r1 = gem_reference(x1, p_param, eps=eps)
    assert o1.shape == (2, 4, 1, 1), o1.shape
    assert jnp.allclose(o1, r1, atol=1e-4, rtol=1e-4), float(jnp.max(jnp.abs(o1 - r1)))

    # Larger spatial map: full-width lane-dense column block, multiple row blocks,
    # still no host-side padding copy.
    x2 = jax.random.uniform(jax.random.fold_in(key, 1), (2, 32, 56, 56),
                            dtype=jnp.float32, minval=-0.5, maxval=2.0)
    o2 = jax.block_until_ready(gem_forward(x2, p_param, eps=eps))
    r2 = gem_reference(x2, p_param, eps=eps)
    assert o2.shape == (2, 32, 1, 1), o2.shape
    assert jnp.allclose(o2, r2, atol=1e-4, rtol=1e-4), float(jnp.max(jnp.abs(o2 - r2)))

    # Force the streaming fallback (tiny block budget) to exercise the column-grid
    # reduction axis, the f32 accumulator and the lane masking of padded columns.
    o3 = jax.block_until_ready(gem_forward(x2, p_param, eps=eps,
                                           block_budget_bytes=8 * 1024))
    assert o3.shape == (2, 32, 1, 1), o3.shape
    assert jnp.allclose(o3, r2, atol=1e-4, rtol=1e-4), float(jnp.max(jnp.abs(o3 - r2)))

    print("KERNEL_OK")
</pallas_src>

<mosaic_0001>
module attributes {stable_mosaic.version = 11 : i64} {
  func.func @_gem_kernel(%arg0: i32, %arg1: i32, %arg2: memref<1xf32, #tpu.memory_space<smem>>, %arg3: memref<8x256xf32, #tpu.memory_space<vmem>>, %arg4: memref<1x1x8xf32, #tpu.memory_space<vmem>>, %arg5: memref<8x1xf32, #tpu.memory_space<vmem>>) attributes {dimension_semantics = [#tpu.dimension_semantics<parallel>, #tpu.dimension_semantics<arbitrary>], iteration_bounds = array<i64: 1, 1>, scalar_prefetch = 0 : i64, scratch_operands = 1 : i64, tpu.core_type = #tpu.core_type<tc>, window_params = [{transform_indices = @transform_0, window_bounds = array<i64: 1>}, {transform_indices = @transform_1, window_bounds = array<i64: 8, 256>}, {transform_indices = @transform_2, window_bounds = array<i64: 1, 1, 8>}]} {
    %c0_i32 = arith.constant 0 : i32
    %0 = arith.cmpi eq, %arg1, %c0_i32 : i32
    %1 = arith.extui %0 : i1 to i32
    %c0_i32_0 = arith.constant 0 : i32
    %2 = arith.cmpi ne, %1, %c0_i32_0 : i32
    scf.if %2 {
      %cst_10 = arith.constant 0.000000e+00 : f32
      %19 = vector.broadcast %cst_10 : f32 to vector<8x1xf32>
      %c0_11 = arith.constant 0 : index
      %c0_12 = arith.constant 0 : index
      %20 = vector.load %arg5[%c0_11, %c0_12] : memref<8x1xf32, #tpu.memory_space<vmem>>, vector<8x1xf32>
      tpu.vector_store %arg5[%c0_11, %c0_12], %19 {strides = array<i32>} : memref<8x1xf32, #tpu.memory_space<vmem>>, vector<8x1xf32>,
    } else {
    }
    %c0 = arith.constant 0 : index
    %3 = memref.load %arg2[%c0] : memref<1xf32, #tpu.memory_space<smem>>
    %c0_1 = arith.constant 0 : index
    %c0_2 = arith.constant 0 : index
    %4 = vector.load %arg3[%c0_1, %c0_2] : memref<8x256xf32, #tpu.memory_space<vmem>>, vector<8x256xf32>
    %cst = arith.constant 9.99999997E-7 : f32
    %5 = vector.broadcast %cst : f32 to vector<8x256xf32>
    %6 = arith.maximumf %4, %5 : vector<8x256xf32>
    %7 = math.log %6 : vector<8x256xf32>
    %8 = vector.broadcast %3 : f32 to vector<8x256xf32>
    %9 = arith.mulf %8, %7 : vector<8x256xf32>
    %10 = math.exp %9 : vector<8x256xf32>
    %c0_3 = arith.constant 0 : index
    %c0_4 = arith.constant 0 : index
    %11 = vector.load %arg5[%c0_3, %c0_4] : memref<8x1xf32, #tpu.memory_space<vmem>>, vector<8x1xf32>
    %cst_5 = arith.constant dense<0.000000e+00> : vector<8xf32>
    %12 = vector.multi_reduction <add>, %10, %cst_5 [1] : vector<8x256xf32> to vector<8xf32>
    %13 = vector.shape_cast %12 : vector<8xf32> to vector<8x1xf32>
    %14 = arith.addf %11, %13 : vector<8x1xf32>
    %c0_6 = arith.constant 0 : index
    %c0_7 = arith.constant 0 : index
    %15 = vector.load %arg5[%c0_6, %c0_7] : memref<8x1xf32, #tpu.memory_space<vmem>>, vector<8x1xf32>
    tpu.vector_store %arg5[%c0_6, %c0_7], %14 {strides = array<i32>} : memref<8x1xf32, #tpu.memory_space<vmem>>, vector<8x1xf32>,
    %c0_i32_8 = arith.constant 0 : i32
    %16 = arith.cmpi eq, %arg1, %c0_i32_8 : i32
    %17 = arith.extui %16 : i1 to i32
    %c0_i32_9 = arith.constant 0 : i32
    %18 = arith.cmpi ne, %17, %c0_i32_9 : i32
    scf.if %18 {
      %cst_10 = arith.constant 1.000000e+00 : f32
      %19 = arith.divf %cst_10, %3 : f32
      %c0_11 = arith.constant 0 : index
      %c0_12 = arith.constant 0 : index
      %20 = vector.load %arg5[%c0_11, %c0_12] : memref<8x1xf32, #tpu.memory_space<vmem>>, vector<8x1xf32>
      %cst_13 = arith.constant 3.906250e-03 : f32
      %21 = vector.broadcast %cst_13 : f32 to vector<8x1xf32>
      %22 = arith.mulf %20, %21 : vector<8x1xf32>
      %23 = math.log %22 : vector<8x1xf32>
      %24 = vector.broadcast %19 : f32 to vector<8x1xf32>
      %25 = arith.mulf %23, %24 : vector<8x1xf32>
      %26 = math.exp %25 : vector<8x1xf32>
      %27 = vector.shape_cast %26 : vector<8x1xf32> to vector<1x1x8xf32>
      %c0_14 = arith.constant 0 : index
      %c0_15 = arith.constant 0 : index
      %c0_16 = arith.constant 0 : index
      %28 = vector.load %arg4[%c0_14, %c0_15, %c0_16] : memref<1x1x8xf32, #tpu.memory_space<vmem>>, vector<1x1x8xf32>
      tpu.vector_store %arg4[%c0_14, %c0_15, %c0_16], %27 {strides = array<i32>} : memref<1x1x8xf32, #tpu.memory_space<vmem>>, vector<1x1x8xf32>,
    } else {
    }
    return
  }
  func.func @transform_0(%arg0: i32, %arg1: i32) -> i32 {
    %c0_i32 = arith.constant 0 : i32
    %c0_i32_0 = arith.constant 0 : i32
    return %c0_i32 : i32
  }
  func.func @transform_1(%arg0: i32, %arg1: i32) -> (i32, i32) {
    %c0_i32 = arith.constant 0 : i32
    return %arg0, %arg1 : i32, i32
  }
  func.func @transform_2(%arg0: i32, %arg1: i32) -> (i32, i32, i32) {
    %c0_i32 = arith.constant 0 : i32
    %c0_i32_0 = arith.constant 0 : i32
    %c0_i32_1 = arith.constant 0 : i32
    return %arg0, %c0_i32, %c0_i32_0 : i32, i32, i32
  }
}

</mosaic_0001>

<llo_original>
// kernel: tpu_custom_call.1
$region0: #{tpu_custom_call.1}
  #allocation0 [shape = 'u32[]', space=smem, size = 0x4, offset = 0x4, fixed_abs, tag = 'smem constant byte address 0x4 - core index']
  #allocation1 [shape = 'u32[72,128]{1,0:T(1,128)}', space=vmem, size = 0x9000, scoped, tag = 'internal scratch']
  #allocation2 [shape = 'f32[8,1]{1,0:T(8,128)}', space=vmem, size = 0x1000, scoped, tag = 'scratch operand']
  #allocation3 [shape = 'f32[1]{0:T(128)S(6)}', space=smem, size = 0x200, scoped, tag = 'scoped memory for tpu_custom_call.1']
  %s0 = inlined_call_operand.<no memory space> [shape: f32[1], index: 0, kind: input, shape index: {}]
  %s1 = inlined_call_operand.hbm [shape: f32[8,256], index: 1, kind: input, shape index: {}]
  %s2 = inlined_call_operand.hbm [shape: f32[1,1,8], index: 2, kind: output, shape index: {}]
  %s3 = sld [smem:[#allocation0]]
  $region30: #{tpu_custom_call.1} parent=0
    _
  %s5 = ssub.s32 1, %s3
  %s6 = scalar_select 0, %s5, %s3
  %7 = sst [smem:[#allocation3]] %s0
  $region1: #{tpu_custom_call.1} parent=0
    #allocation4 [shape = 'u8[8192]{0}', space=vmem, size = 0x2000, scoped, tag = 'input window, operand 1, single buffered']
    #allocation5 [shape = 's32[1]{0}', space=sflag, size = 0x4, scoped, tag = 'scoped memory for tpu_custom_call.1']
    #allocation6 [shape = 's32[1]{0}', space=sflag, size = 0x4, scoped, tag = 'scoped memory for tpu_custom_call.1']
    #allocation7 [shape = 'u8[512]{0}', space=vmem, size = 0x400, scoped, tag = 'output window, operand 0, single buffered']
    %8 = vsyncpa [#allocation5], 0
    %9 = vsyncpa [#allocation6], 0
    // Predicated region
    $region2: #{tpu_custom_call.1} parent=1 // pred_check
      _
    $region3: #{tpu_custom_call.1} parent=1 // pred_check_branch
      %11 = sbr.rel (0) target = $region5
    $region4: #{tpu_custom_call.1} parent=1 // pred_region
      _
    $region5: #{tpu_custom_call.1} parent=1 // pred_fallthru
      _
    // Predicated region
    $region6: #{tpu_custom_call.1} parent=1 // pred_check
      _
    $region7: #{tpu_custom_call.1} parent=1 // pred_check_branch
      %13 = sbr.rel (0) target = $region9
    $region8: #{tpu_custom_call.1} parent=1 // pred_region
      %15 = vsyncadd [#allocation5], 0
      %s17 = sshll.u32 %s1, 4
      %s18 = int_to_ptr.hbm [resolvable:$true] %s17
      %s19 = sshll.u32 [#allocation4], 4
      %s20 = int_to_ptr.vmem [resolvable:$true] %s19
      %22 = dma.hbm_to_vmem [thread:$0]  %s18, 256, %s20, [#allocation5]
    $region9: #{tpu_custom_call.1} parent=1 // pred_fallthru
      _
    // Predicated region
    $region10: #{tpu_custom_call.1} parent=1 // pred_check
      _
    $region11: #{tpu_custom_call.1} parent=1 // pred_check_branch
      %24 = sbr.rel (0) target = $region13
    $region12: #{tpu_custom_call.1} parent=1 // pred_region
      %26 = dma.done [#allocation5], 256
    $region13: #{tpu_custom_call.1} parent=1 // pred_fallthru
      _
    %p27 = scmp.eq.s32.totalorder 0, 0
    // Predicated region
    $region14: #{tpu_custom_call.1} parent=1 // pred_check
      %p28 = pneg %p27
    $region15: #{tpu_custom_call.1} parent=1 // pred_check_branch
      %30 = sbr.rel (%p28) target = $region17
    $region16: #{tpu_custom_call.1} parent=1 // pred_region
      %vm31 = vcmask 7168
      %32 = vst.msk [vmem:[#allocation2] sm:$0xff] %vm31, 0.0
    $region17: #{tpu_custom_call.1} parent=1 // pred_fallthru
      _
    %s33 = sld [smem:[#allocation3]]
    %v34 = vld [vmem:[#allocation4] sm:$0xff]
    %v35 = vld [vmem:[#allocation4 + $0x8] sm:$0xff]
    %v36 = vmax.f32 %v34, 1e-06
    %v37 = vmax.f32 %v35, 1e-06
    %v38 = vlog2.pop %v36
    %v39 = vmul.f32 %v38, 0.6931472
    %v40 = vlog2.pop %v37
    %v41 = vmul.f32 %v40, 0.6931472
    %v42 = vstv %s33
    %v43 = vmul.f32 %v42, %v39
    %v44 = vmul.f32 %v42, %v41
    %v45 = vmul.f32 %v43, 1.442695
    %v46 = vpow.pop %v45
    %v47 = vmul.f32 %v44, 1.442695
    %v48 = vpow.pop %v47
    %v49 = vld [vmem:[#allocation2] sm:$0xff]
    %v50 = vadd.f32 %v46, %v48
    %51 = vadd.xlane.f32.xlu0 %v50
    %v52 = vpop.xlane.xlu0 %51
    %v53 = vadd.f32 %v49, %v52
    %vm54 = vcmask 7168
    %55 = vst.msk [vmem:[#allocation2] sm:$0xff] %vm54, %v53
    // Predicated region
    $region18: #{tpu_custom_call.1} parent=1 // pred_check
      %p56 = pneg %p27
    $region19: #{tpu_custom_call.1} parent=1 // pred_check_branch
      %58 = sbr.rel (%p56) target = $region21
    $region20: #{tpu_custom_call.1} parent=1 // pred_region
      %v59 = vstv %s33
      %v60 = vrcp.pop %v59
      %v61 = vmul.f32 %v59, %v60
      %v62 = vsub.f32 1.0, %v61
      %v63 = vmul.f32 %v60, %v62
      %v64 = vadd.f32 %v60, %v63
      %vm65 = vweird.f32 %v59
      %vm66 = vweird.f32 %v60
      %vm67 = vmor %vm65, %vm66
      %v68 = vsel %vm67, %v60, %v64
      %v69 = vand.u32 2147483647, %v59
      %vm70 = vcmp.eq.f32.partialorder %v69, 8.507059e+37
      %v71 = vand.u32 %v59, 2147483648
      %v72 = vor.u32 1.1754944e-38, %v71
      %v73 = vsel %vm70, %v72, %v68
      %s74 = vtos %v73
      %v75 = vld [vmem:[#allocation2] sm:$0xff]
      %v76 = vmul.f32 %v75, 0.00390625
      %v77 = vlog2.pop %v76
      %v78 = vmul.f32 %v77, 0.6931472
      %v79 = vstv %s74
      %v80 = vmul.f32 %v78, %v79
      %v81 = vmul.f32 %v80, 1.442695
      %v82 = vpow.pop %v81
      %84 = vset.pattern.permute.xlu0 0
      %85 = vperm.xlu0 %84, %v82
      %v86 = vpop.permute.xlu0 %85
      %v87 = vlaneseq
      %v88 = vand.u32 %v87, 127
      %v89 = vperm.slane %v86, %v88
      %vm91 = vcmask 57344
      %92 = vst.msk [vmem:[#allocation7] sm:$0x1] %vm91, %v89
    $region21: #{tpu_custom_call.1} parent=1 // pred_fallthru
      _
    // Predicated region
    $region22: #{tpu_custom_call.1} parent=1 // pred_check
      _
    $region23: #{tpu_custom_call.1} parent=1 // pred_check_branch
      %94 = sbr.rel (0) target = $region25
    $region24: #{tpu_custom_call.1} parent=1 // pred_region
      %96 = vsyncadd [#allocation6], 0
      %s98 = sshll.u32 [#allocation7], 4
      %s99 = int_to_ptr.vmem [resolvable:$true] %s98
      %s100 = sshll.u32 %s2, 4
      %s101 = int_to_ptr.hbm [resolvable:$true] %s100
      %103 = dma.vmem_to_hbm [thread:$0]  %s99, 16, %s101, [#allocation6]
    $region25: #{tpu_custom_call.1} parent=1 // pred_fallthru
      _
    // Predicated region
    $region26: #{tpu_custom_call.1} parent=1 // pred_check
      _
    $region27: #{tpu_custom_call.1} parent=1 // pred_check_branch
      %105 = sbr.rel (0) target = $region29
    $region28: #{tpu_custom_call.1} parent=1 // pred_region
      %107 = dma.done [#allocation6], 16
    $region29: #{tpu_custom_call.1} parent=1 // pred_fallthru
      _
    %108 = vsyncpa [#allocation5], 1
    %109 = vsyncpa [#allocation6], 1

</llo_original>
